<compile_context>
chip_gen: v6e
topology: v6e:2x2x1
jax: 0.10.0
libtpu: 0.0.40
codegen_flags: <defaults>
</compile_context>

<pallas_src>
import math

import jax
import jax.numpy as jnp
from jax.experimental import pallas as pl
from jax.experimental.pallas import tpu as pltpu


def _round_up(x, m):
    return ((x + m - 1) // m) * m


def _qc_fused_kernel(xu_ref, w1_ref, b1_ref, w2_ref, b2_ref, w3_ref, b3_ref, o_ref):
    f32 = jnp.float32

    # layer 1: (TB, Din) @ (Din, E*H) -- all ensemble members fused along lanes
    h1 = jnp.dot(xu_ref[...], w1_ref[...], preferred_element_type=f32)
    h1 = h1 + b1_ref[...]                   # f32 bias + SiLU (VPU/EUP; v5e is f32-only)
    h1 = h1 * jax.nn.sigmoid(h1)
    h1 = h1.astype(w2_ref.dtype)
    # TODO(synk): on v6e/v7x the bias+SiLU block could run in bf16 to halve
    # VALU/EUP work and vreg pressure; kept f32 for v5e and tight numerics.

    # layer 2
    if len(w2_ref.shape) == 2:
        # E*H <= 128: block-diagonal (EH, EH) is a single MXU pass -> free
        h2 = jnp.dot(h1, w2_ref[...], preferred_element_type=f32)
    else:
        # E*H > 128: per-member (TB,H)@(H,H) matmuls (unrolled; E is static).
        # Avoids the E x wasted MXU FLOPs and E x W2 VMEM of dense block-diag.
        E, H, _ = w2_ref.shape
        parts = [
            jnp.dot(h1[:, e * H:(e + 1) * H], w2_ref[e], preferred_element_type=f32)
            for e in range(E)
        ]
        h2 = jnp.concatenate(parts, axis=1)
    h2 = h2 + b2_ref[...]
    h2 = h2 * jax.nn.sigmoid(h2)
    h2 = h2.astype(w3_ref.dtype)

    # layer 3: stacked (E*H, Eo) matmul; Eo = E zero-padded to 128 lanes so the
    # output store is lane-dense (unmasked vst).
    out = jnp.dot(h2, w3_ref[...], preferred_element_type=f32)
    out = out + b3_ref[...]
    o_ref[...] = out.astype(o_ref.dtype)


def pack_qc_ensemble_params(params, *, compute_dtype=jnp.bfloat16,
                            fuse_layer2_max=128, out_lanes=128):
    """One-time repack of per-member (E, ...) weights into fused MXU layouts.

    Call once at init / after parameter updates -- NOT per forward call.
    """
    f32 = jnp.float32
    w1, b1, w2, b2, w3, b3 = (params[k] for k in ("w1", "b1", "w2", "b2", "w3", "b3"))
    E, din, H = w1.shape
    EH = E * H
    Eo = _round_up(max(E, out_lanes), out_lanes)      # lane-dense output columns
    eye = jnp.eye(E, dtype=f32)

    # layer 1: (E, Din, H) -> (Din, E*H)
    w1f = jnp.transpose(w1.astype(f32), (1, 0, 2)).reshape(din, EH)

    # layer 2: tiny fused block-diagonal (one MXU pass) or stacked per-member
    if EH <= fuse_layer2_max:
        w2p = (w2.astype(f32)[:, None] * eye[:, :, None, None])      # (E,E,H,H)
        w2p = jnp.transpose(w2p, (0, 2, 1, 3)).reshape(EH, EH)       # block-diag
    else:
        w2p = w2.astype(f32)                                          # (E,H,H)

    # layer 3: stacked (E*H, E), zero-padded to Eo lanes
    w3p = (w3.astype(f32)[:, None] * eye[:, :, None, None])          # (E,E,H,1)
    w3p = jnp.transpose(w3p, (0, 2, 1, 3)).reshape(EH, E)
    w3p = jnp.pad(w3p, ((0, 0), (0, Eo - E)))
    b3p = jnp.pad(b3.astype(f32).reshape(1, E), ((0, 0), (0, Eo - E)))

    # TODO(synk): on v7x, fp8 for w1/w2 would halve weight VMEM again if the
    # accuracy budget allows (v7x MXU supports bf16+fp8).
    return {
        "w1": w1f.astype(compute_dtype),
        "b1": b1.astype(f32).reshape(1, EH),
        "w2": w2p.astype(compute_dtype),
        "b2": b2.astype(f32).reshape(1, EH),
        "w3": w3p.astype(compute_dtype),
        "b3": b3p,
        "ensemble_size": E,        # static meta (python int)
        "hidden_size": H,
    }


def qc_ensemble_forward(state, action, packed, *, block_b=512):
    """state: (B, S), action: (B, A)  ->  (E, B, 1), matching torch QcEnsemble.forward."""
    w1, b1, w2, b2, w3, b3 = (packed[k] for k in ("w1", "b1", "w2", "b2", "w3", "b3"))
    E = packed["ensemble_size"]
    din, EH = w1.shape
    Eo = w3.shape[1]
    cd = w1.dtype
    B, S = state.shape
    A = action.shape[1]
    assert din == S + A, (din, S, A)

    # concat in the wrapper (costs only B*Din bytes of HBM) -> one K=Din matmul
    xu = jnp.concatenate([state, action], axis=1).astype(cd)

    # batch tiling: big tiles amortize ~0.35us/step grid overhead; balanced so
    # B > block_b still gives each TensorCore similar-size tiles on v7x.
    sub = 16 if cd == jnp.bfloat16 else 8
    n_tiles = max(1, pl.cdiv(B, block_b))
    TB = _round_up(pl.cdiv(B, n_tiles), sub)
    B_pad = _round_up(B, TB)
    if B_pad != B:
        xu = jnp.pad(xu, ((0, B_pad - B), (0, 0)))

    # explicit scoped-VMEM budget with headroom (v7x has only 64 MiB physical)
    w_bytes = sum(int(a.size) * a.dtype.itemsize for a in (w1, b1, w2, b2, w3, b3))
    act_bytes = TB * (din * xu.dtype.itemsize + 3 * EH * 4 + Eo * 4)
    vmem_limit = int(min(64 << 20, max(16 << 20, 4 * (w_bytes + act_bytes))))

    def build(single_buffer_weights):
        def wspec(shape):
            idx = lambda i: (0,) * len(shape)      # constant block index: VMEM-resident
            if single_buffer_weights:
                # never changes block index -> double-buffering is wasted VMEM
                return pl.BlockSpec(shape, idx, pipeline_mode=pl.Buffered(1))
            return pl.BlockSpec(shape, idx)

        return pl.pallas_call(
            _qc_fused_kernel,
            out_shape=jax.ShapeDtypeStruct((B_pad, Eo), jnp.float32),
            grid_spec=pltpu.PrefetchScalarGridSpec(
                num_scalar_prefetch=0,
                grid=(B_pad // TB,),
                in_specs=[
                    pl.BlockSpec((TB, din), lambda i: (i, 0)),   # xu batch tile
                    wspec(w1.shape), wspec(b1.shape),
                    wspec(w2.shape), wspec(b2.shape),
                    wspec(w3.shape), wspec(b3.shape),
                ],
                out_specs=pl.BlockSpec((TB, Eo), lambda i: (i, 0)),
            ),
            compiler_params=pltpu.CompilerParams(
                dimension_semantics=("parallel",),    # v7x megacore splits batch tiles
                vmem_limit_bytes=vmem_limit),
        )

    args = (xu, w1, b1, w2, b2, w3, b3)
    try:
        out = build(True)(*args)
    except Exception:
        # fallback for jax builds that reject single-buffered top-level BlockSpecs
        out = build(False)(*args)

    # (B_pad, Eo) lane-dense kernel output -> (E, B, 1) to match torch
    return jnp.transpose(out[:B, :E])[:, :, None]


# ----------------------------- init & reference -----------------------------

def _trunc_normal(key, shape, std):
    # truncated normal on [-2*std, 2*std], matching init_weights semantics
    return std * jax.random.truncated_normal(key, -2.0, 2.0, shape, dtype=jnp.float32)


def init_qc_ensemble_params(key, state_size, action_size, ensemble_size, hidden_size):
    din = state_size + action_size
    k1, k2, k3 = jax.random.split(key, 3)
    return {
        "w1": _trunc_normal(k1, (ensemble_size, din, hidden_size), 1.0 / (2.0 * math.sqrt(din))),
        "b1": jnp.zeros((ensemble_size, hidden_size), jnp.float32),
        "w2": _trunc_normal(k2, (ensemble_size, hidden_size, hidden_size), 1.0 / (2.0 * math.sqrt(hidden_size))),
        "b2": jnp.zeros((ensemble_size, hidden_size), jnp.float32),
        "w3": _trunc_normal(k3, (ensemble_size, hidden_size, 1), 1.0 / (2.0 * math.sqrt(hidden_size))),
        "b3": jnp.zeros((ensemble_size, 1), jnp.float32),
    }


def _reference_forward(state, action, params):
    # pure-JAX reference of the PyTorch forward (bmm + bias, SiLU)
    xu = jnp.concatenate([state, action], axis=1)
    x = jnp.broadcast_to(xu[None], (params["w1"].shape[0],) + xu.shape)
    h1 = jnp.einsum("ebi,eio->ebo", x, params["w1"]) + params["b1"][:, None, :]
    h1 = h1 * jax.nn.sigmoid(h1)
    h2 = jnp.einsum("ebi,eio->ebo", h1, params["w2"]) + params["b2"][:, None, :]
    h2 = h2 * jax.nn.sigmoid(h2)
    return jnp.einsum("ebi,eio->ebo", h2, params["w3"]) + params["b3"][:, None, :]


if __name__ == "__main__":
    key = jax.random.PRNGKey(0)

    # --- config 1: E*H = 128 -> fused block-diagonal layer-2 path ---
    state_size, action_size, ensemble_size, hidden_size, batch = 12, 4, 4, 32, 8
    kp, ks, ka, key = jax.random.split(key, 4)
    params = init_qc_ensemble_params(kp, state_size, action_size, ensemble_size, hidden_size)
    state = jax.random.normal(ks, (batch, state_size), dtype=jnp.float32)
    action = jax.random.normal(ka, (batch, action_size), dtype=jnp.float32)
    ref = _reference_forward(state, action, params)

    # default: bf16 MXU operands, f32 accumulation/elementwise -> loose tolerance
    packed_bf16 = pack_qc_ensemble_params(params)                      # one-time pack
    out = jax.block_until_ready(qc_ensemble_forward(state, action, packed_bf16))
    assert out.shape == (ensemble_size, batch, 1), out.shape
    assert jnp.allclose(out, ref, atol=1e-2, rtol=5e-2), float(jnp.max(jnp.abs(out - ref)))

    # full f32 path -> tight tolerance
    packed_f32 = pack_qc_ensemble_params(params, compute_dtype=jnp.float32)
    out32 = jax.block_until_ready(qc_ensemble_forward(state, action, packed_f32))
    assert out32.shape == (ensemble_size, batch, 1), out32.shape
    assert jnp.allclose(out32, ref, atol=1e-5, rtol=1e-5), float(jnp.max(jnp.abs(out32 - ref)))

    # --- config 2: E*H = 256 > 128 -> per-member layer-2 path ---
    state_size, action_size, ensemble_size, hidden_size, batch = 12, 4, 2, 128, 8
    kp, ks, ka, key = jax.random.split(key, 4)
    params2 = init_qc_ensemble_params(kp, state_size, action_size, ensemble_size, hidden_size)
    state2 = jax.random.normal(ks, (batch, state_size), dtype=jnp.float32)
    action2 = jax.random.normal(ka, (batch, action_size), dtype=jnp.float32)
    ref2 = _reference_forward(state2, action2, params2)

    packed2 = pack_qc_ensemble_params(params2, compute_dtype=jnp.float32)
    out2 = jax.block_until_ready(qc_ensemble_forward(state2, action2, packed2))
    assert out2.shape == (ensemble_size, batch, 1), out2.shape
    assert jnp.allclose(out2, ref2, atol=3e-5, rtol=3e-5), float(jnp.max(jnp.abs(out2 - ref2)))

    print("KERNEL_OK")
</pallas_src>

<mosaic_0001>
module attributes {stable_mosaic.version = 11 : i64} {
  func.func @_qc_fused_kernel(%arg0: i32, %arg1: memref<16x16xbf16, #tpu.memory_space<vmem>>, %arg2: memref<16x128xbf16, #tpu.memory_space<vmem>>, %arg3: memref<1x128xf32, #tpu.memory_space<vmem>>, %arg4: memref<128x128xbf16, #tpu.memory_space<vmem>>, %arg5: memref<1x128xf32, #tpu.memory_space<vmem>>, %arg6: memref<128x128xbf16, #tpu.memory_space<vmem>>, %arg7: memref<1x128xf32, #tpu.memory_space<vmem>>, %arg8: memref<16x128xf32, #tpu.memory_space<vmem>>) attributes {dimension_semantics = [#tpu.dimension_semantics<parallel>], iteration_bounds = array<i64: 1>, scalar_prefetch = 0 : i64, scratch_operands = 0 : i64, tpu.core_type = #tpu.core_type<tc>, window_params = [{transform_indices = @transform_0, window_bounds = array<i64: 16, 16>}, {pipeline_mode = #tpu.pipeline_mode<synchronous>, transform_indices = @transform_1, window_bounds = array<i64: 16, 128>}, {pipeline_mode = #tpu.pipeline_mode<synchronous>, transform_indices = @transform_2, window_bounds = array<i64: 1, 128>}, {pipeline_mode = #tpu.pipeline_mode<synchronous>, transform_indices = @transform_3, window_bounds = array<i64: 128, 128>}, {pipeline_mode = #tpu.pipeline_mode<synchronous>, transform_indices = @transform_4, window_bounds = array<i64: 1, 128>}, {pipeline_mode = #tpu.pipeline_mode<synchronous>, transform_indices = @transform_5, window_bounds = array<i64: 128, 128>}, {pipeline_mode = #tpu.pipeline_mode<synchronous>, transform_indices = @transform_6, window_bounds = array<i64: 1, 128>}, {transform_indices = @transform_7, window_bounds = array<i64: 16, 128>}]} {
    %c0 = arith.constant 0 : index
    %c0_0 = arith.constant 0 : index
    %0 = vector.load %arg1[%c0, %c0_0] : memref<16x16xbf16, #tpu.memory_space<vmem>>, vector<16x16xbf16>
    %c0_1 = arith.constant 0 : index
    %c0_2 = arith.constant 0 : index
    %1 = vector.load %arg2[%c0_1, %c0_2] : memref<16x128xbf16, #tpu.memory_space<vmem>>, vector<16x128xbf16>
    %cst = arith.constant dense<0.000000e+00> : vector<16x128xf32>
    %2 = tpu.matmul %0, %1, %cst {dimension_numbers = #tpu.dot_dimension_numbers<[1], [0], [0], [1], [0, 0, 1, 1], [], []>} : vector<16x16xbf16>, vector<16x128xbf16>, vector<16x128xf32> -> vector<16x128xf32>
    %c0_3 = arith.constant 0 : index
    %c0_4 = arith.constant 0 : index
    %3 = vector.load %arg3[%c0_3, %c0_4] : memref<1x128xf32, #tpu.memory_space<vmem>>, vector<1x128xf32>
    %4 = vector.broadcast %3 : vector<1x128xf32> to vector<16x128xf32>
    %5 = arith.addf %2, %4 : vector<16x128xf32>
    %6 = arith.negf %5 : vector<16x128xf32>
    %7 = math.exp %6 : vector<16x128xf32>
    %cst_5 = arith.constant 1.000000e+00 : f32
    %8 = vector.broadcast %cst_5 : f32 to vector<16x128xf32>
    %9 = arith.addf %8, %7 : vector<16x128xf32>
    %10 = arith.divf %8, %9 : vector<16x128xf32>
    %11 = arith.mulf %5, %10 : vector<16x128xf32>
    %12 = arith.truncf %11 : vector<16x128xf32> to vector<16x128xbf16>
    %c0_6 = arith.constant 0 : index
    %c0_7 = arith.constant 0 : index
    %13 = vector.load %arg4[%c0_6, %c0_7] : memref<128x128xbf16, #tpu.memory_space<vmem>>, vector<128x128xbf16>
    %cst_8 = arith.constant dense<0.000000e+00> : vector<16x128xf32>
    %14 = tpu.matmul %12, %13, %cst_8 {dimension_numbers = #tpu.dot_dimension_numbers<[1], [0], [0], [1], [0, 0, 1, 1], [], []>} : vector<16x128xbf16>, vector<128x128xbf16>, vector<16x128xf32> -> vector<16x128xf32>
    %c0_9 = arith.constant 0 : index
    %c0_10 = arith.constant 0 : index
    %15 = vector.load %arg5[%c0_9, %c0_10] : memref<1x128xf32, #tpu.memory_space<vmem>>, vector<1x128xf32>
    %16 = vector.broadcast %15 : vector<1x128xf32> to vector<16x128xf32>
    %17 = arith.addf %14, %16 : vector<16x128xf32>
    %18 = arith.negf %17 : vector<16x128xf32>
    %19 = math.exp %18 : vector<16x128xf32>
    %cst_11 = arith.constant 1.000000e+00 : f32
    %20 = vector.broadcast %cst_11 : f32 to vector<16x128xf32>
    %21 = arith.addf %20, %19 : vector<16x128xf32>
    %22 = arith.divf %20, %21 : vector<16x128xf32>
    %23 = arith.mulf %17, %22 : vector<16x128xf32>
    %24 = arith.truncf %23 : vector<16x128xf32> to vector<16x128xbf16>
    %c0_12 = arith.constant 0 : index
    %c0_13 = arith.constant 0 : index
    %25 = vector.load %arg6[%c0_12, %c0_13] : memref<128x128xbf16, #tpu.memory_space<vmem>>, vector<128x128xbf16>
    %cst_14 = arith.constant dense<0.000000e+00> : vector<16x128xf32>
    %26 = tpu.matmul %24, %25, %cst_14 {dimension_numbers = #tpu.dot_dimension_numbers<[1], [0], [0], [1], [0, 0, 1, 1], [], []>} : vector<16x128xbf16>, vector<128x128xbf16>, vector<16x128xf32> -> vector<16x128xf32>
    %c0_15 = arith.constant 0 : index
    %c0_16 = arith.constant 0 : index
    %27 = vector.load %arg7[%c0_15, %c0_16] : memref<1x128xf32, #tpu.memory_space<vmem>>, vector<1x128xf32>
    %28 = vector.broadcast %27 : vector<1x128xf32> to vector<16x128xf32>
    %29 = arith.addf %26, %28 : vector<16x128xf32>
    %c0_17 = arith.constant 0 : index
    %c0_18 = arith.constant 0 : index
    %30 = vector.load %arg8[%c0_17, %c0_18] : memref<16x128xf32, #tpu.memory_space<vmem>>, vector<16x128xf32>
    tpu.vector_store %arg8[%c0_17, %c0_18], %29 {strides = array<i32>} : memref<16x128xf32, #tpu.memory_space<vmem>>, vector<16x128xf32>,
    return
  }
  func.func @transform_0(%arg0: i32) -> (i32, i32) {
    %c0_i32 = arith.constant 0 : i32
    %c0_i32_0 = arith.constant 0 : i32
    return %arg0, %c0_i32 : i32, i32
  }
  func.func @transform_1(%arg0: i32) -> (i32, i32) {
    %c0_i32 = arith.constant 0 : i32
    %c0_i32_0 = arith.constant 0 : i32
    %c0_i32_1 = arith.constant 0 : i32
    return %c0_i32, %c0_i32_0 : i32, i32
  }
  func.func @transform_2(%arg0: i32) -> (i32, i32) {
    %c0_i32 = arith.constant 0 : i32
    %c0_i32_0 = arith.constant 0 : i32
    %c0_i32_1 = arith.constant 0 : i32
    return %c0_i32, %c0_i32_0 : i32, i32
  }
  func.func @transform_3(%arg0: i32) -> (i32, i32) {
    %c0_i32 = arith.constant 0 : i32
    %c0_i32_0 = arith.constant 0 : i32
    %c0_i32_1 = arith.constant 0 : i32
    return %c0_i32, %c0_i32_0 : i32, i32
  }
  func.func @transform_4(%arg0: i32) -> (i32, i32) {
    %c0_i32 = arith.constant 0 : i32
    %c0_i32_0 = arith.constant 0 : i32
    %c0_i32_1 = arith.constant 0 : i32
    return %c0_i32, %c0_i32_0 : i32, i32
  }
  func.func @transform_5(%arg0: i32) -> (i32, i32) {
    %c0_i32 = arith.constant 0 : i32
    %c0_i32_0 = arith.constant 0 : i32
    %c0_i32_1 = arith.constant 0 : i32
    return %c0_i32, %c0_i32_0 : i32, i32
  }
  func.func @transform_6(%arg0: i32) -> (i32, i32) {
    %c0_i32 = arith.constant 0 : i32
    %c0_i32_0 = arith.constant 0 : i32
    %c0_i32_1 = arith.constant 0 : i32
    return %c0_i32, %c0_i32_0 : i32, i32
  }
  func.func @transform_7(%arg0: i32) -> (i32, i32) {
    %c0_i32 = arith.constant 0 : i32
    %c0_i32_0 = arith.constant 0 : i32
    return %arg0, %c0_i32 : i32, i32
  }
}

module attributes {stable_mosaic.version = 11 : i64} {
  func.func @_qc_fused_kernel(%arg0: i32, %arg1: memref<16x16xbf16, #tpu.memory_space<vmem>>, %arg2: memref<16x128xbf16, #tpu.memory_space<vmem>>, %arg3: memref<1x128xf32, #tpu.memory_space<vmem>>, %arg4: memref<128x128xbf16, #tpu.memory_space<vmem>>, %arg5: memref<1x128xf32, #tpu.memory_space<vmem>>, %arg6: memref<128x128xbf16, #tpu.memory_space<vmem>>, %arg7: memref<1x128xf32, #tpu.memory_space<vmem>>, %arg8: memref<16x128xf32, #tpu.memory_space<vmem>>) attributes {dimension_semantics = [#tpu.dimension_semantics<parallel>], iteration_bounds = array<i64: 1>, scalar_prefetch = 0 : i64, scratch_operands = 0 : i64, tpu.core_type = #tpu.core_type<tc>, window_params = [{transform_indices = @transform_0, window_bounds = array<i64: 16, 16>}, {pipeline_mode = #tpu.pipeline_mode<synchronous>, transform_indices = @transform_1, window_bounds = array<i64: 16, 128>}, {pipeline_mode = #tpu.pipeline_mode<synchronous>, transform_indices = @transform_2, window_bounds = array<i64: 1, 128>}, {pipeline_mode = #tpu.pipeline_mode<synchronous>, transform_indices = @transform_3, window_bounds = array<i64: 128, 128>}, {pipeline_mode = #tpu.pipeline_mode<synchronous>, transform_indices = @transform_4, window_bounds = array<i64: 1, 128>}, {pipeline_mode = #tpu.pipeline_mode<synchronous>, transform_indices = @transform_5, window_bounds = array<i64: 128, 128>}, {pipeline_mode = #tpu.pipeline_mode<synchronous>, transform_indices = @transform_6, window_bounds = array<i64: 1, 128>}, {transform_indices = @transform_7, window_bounds = array<i64: 16, 128>}]} {
    %c0 = arith.constant 0 : index
    %c0_0 = arith.constant 0 : index
    %0 = vector.load %arg1[%c0, %c0_0] : memref<16x16xbf16, #tpu.memory_space<vmem>>, vector<16x16xbf16>
    %c0_1 = arith.constant 0 : index
    %c0_2 = arith.constant 0 : index
    %1 = vector.load %arg2[%c0_1, %c0_2] : memref<16x128xbf16, #tpu.memory_space<vmem>>, vector<16x128xbf16>
    %cst = arith.constant dense<0.000000e+00> : vector<16x128xf32>
    %2 = tpu.matmul %0, %1, %cst {dimension_numbers = #tpu.dot_dimension_numbers<[1], [0], [0], [1], [0, 0, 1, 1], [], []>} : vector<16x16xbf16>, vector<16x128xbf16>, vector<16x128xf32> -> vector<16x128xf32>
    %c0_3 = arith.constant 0 : index
    %c0_4 = arith.constant 0 : index
    %3 = vector.load %arg3[%c0_3, %c0_4] : memref<1x128xf32, #tpu.memory_space<vmem>>, vector<1x128xf32>
    %4 = vector.broadcast %3 : vector<1x128xf32> to vector<16x128xf32>
    %5 = arith.addf %2, %4 : vector<16x128xf32>
    %6 = arith.negf %5 : vector<16x128xf32>
    %7 = math.exp %6 : vector<16x128xf32>
    %cst_5 = arith.constant 1.000000e+00 : f32
    %8 = vector.broadcast %cst_5 : f32 to vector<16x128xf32>
    %9 = arith.addf %8, %7 : vector<16x128xf32>
    %10 = arith.divf %8, %9 : vector<16x128xf32>
    %11 = arith.mulf %5, %10 : vector<16x128xf32>
    %12 = arith.truncf %11 : vector<16x128xf32> to vector<16x128xbf16>
    %c0_6 = arith.constant 0 : index
    %c0_7 = arith.constant 0 : index
    %13 = vector.load %arg4[%c0_6, %c0_7] : memref<128x128xbf16, #tpu.memory_space<vmem>>, vector<128x128xbf16>
    %cst_8 = arith.constant dense<0.000000e+00> : vector<16x128xf32>
    %14 = tpu.matmul %12, %13, %cst_8 {dimension_numbers = #tpu.dot_dimension_numbers<[1], [0], [0], [1], [0, 0, 1, 1], [], []>} : vector<16x128xbf16>, vector<128x128xbf16>, vector<16x128xf32> -> vector<16x128xf32>
    %c0_9 = arith.constant 0 : index
    %c0_10 = arith.constant 0 : index
    %15 = vector.load %arg5[%c0_9, %c0_10] : memref<1x128xf32, #tpu.memory_space<vmem>>, vector<1x128xf32>
    %16 = vector.broadcast %15 : vector<1x128xf32> to vector<16x128xf32>
    %17 = arith.addf %14, %16 : vector<16x128xf32>
    %18 = arith.negf %17 : vector<16x128xf32>
    %19 = math.exp %18 : vector<16x128xf32>
    %cst_11 = arith.constant 1.000000e+00 : f32
    %20 = vector.broadcast %cst_11 : f32 to vector<16x128xf32>
    %21 = arith.addf %20, %19 : vector<16x128xf32>
    %22 = arith.divf %20, %21 : vector<16x128xf32>
    %23 = arith.mulf %17, %22 : vector<16x128xf32>
    %24 = arith.truncf %23 : vector<16x128xf32> to vector<16x128xbf16>
    %c0_12 = arith.constant 0 : index
    %c0_13 = arith.constant 0 : index
    %25 = vector.load %arg6[%c0_12, %c0_13] : memref<128x128xbf16, #tpu.memory_space<vmem>>, vector<128x128xbf16>
    %cst_14 = arith.constant dense<0.000000e+00> : vector<16x128xf32>
    %26 = tpu.matmul %24, %25, %cst_14 {dimension_numbers = #tpu.dot_dimension_numbers<[1], [0], [0], [1], [0, 0, 1, 1], [], []>} : vector<16x128xbf16>, vector<128x128xbf16>, vector<16x128xf32> -> vector<16x128xf32>
    %c0_15 = arith.constant 0 : index
    %c0_16 = arith.constant 0 : index
    %27 = vector.load %arg7[%c0_15, %c0_16] : memref<1x128xf32, #tpu.memory_space<vmem>>, vector<1x128xf32>
    %28 = vector.broadcast %27 : vector<1x128xf32> to vector<16x128xf32>
    %29 = arith.addf %26, %28 : vector<16x128xf32>
    %c0_17 = arith.constant 0 : index
    %c0_18 = arith.constant 0 : index
    %30 = vector.load %arg8[%c0_17, %c0_18] : memref<16x128xf32, #tpu.memory_space<vmem>>, vector<16x128xf32>
    tpu.vector_store %arg8[%c0_17, %c0_18], %29 {strides = array<i32>} : memref<16x128xf32, #tpu.memory_space<vmem>>, vector<16x128xf32>,
    return
  }
  func.func @transform_0(%arg0: i32) -> (i32, i32) {
    %c0_i32 = arith.constant 0 : i32
    %c0_i32_0 = arith.constant 0 : i32
    return %arg0, %c0_i32 : i32, i32
  }
  func.func @transform_1(%arg0: i32) -> (i32, i32) {
    %c0_i32 = arith.constant 0 : i32
    %c0_i32_0 = arith.constant 0 : i32
    %c0_i32_1 = arith.constant 0 : i32
    return %c0_i32, %c0_i32_0 : i32, i32
  }
  func.func @transform_2(%arg0: i32) -> (i32, i32) {
    %c0_i32 = arith.constant 0 : i32
    %c0_i32_0 = arith.constant 0 : i32
    %c0_i32_1 = arith.constant 0 : i32
    return %c0_i32, %c0_i32_0 : i32, i32
  }
  func.func @transform_3(%arg0: i32) -> (i32, i32) {
    %c0_i32 = arith.constant 0 : i32
    %c0_i32_0 = arith.constant 0 : i32
    %c0_i32_1 = arith.constant 0 : i32
    return %c0_i32, %c0_i32_0 : i32, i32
  }
  func.func @transform_4(%arg0: i32) -> (i32, i32) {
    %c0_i32 = arith.constant 0 : i32
    %c0_i32_0 = arith.constant 0 : i32
    %c0_i32_1 = arith.constant 0 : i32
    return %c0_i32, %c0_i32_0 : i32, i32
  }
  func.func @transform_5(%arg0: i32) -> (i32, i32) {
    %c0_i32 = arith.constant 0 : i32
    %c0_i32_0 = arith.constant 0 : i32
    %c0_i32_1 = arith.constant 0 : i32
    return %c0_i32, %c0_i32_0 : i32, i32
  }
  func.func @transform_6(%arg0: i32) -> (i32, i32) {
    %c0_i32 = arith.constant 0 : i32
    %c0_i32_0 = arith.constant 0 : i32
    %c0_i32_1 = arith.constant 0 : i32
    return %c0_i32, %c0_i32_0 : i32, i32
  }
  func.func @transform_7(%arg0: i32) -> (i32, i32) {
    %c0_i32 = arith.constant 0 : i32
    %c0_i32_0 = arith.constant 0 : i32
    return %arg0, %c0_i32 : i32, i32
  }
}

</mosaic_0001>

<llo_original>
// kernel: tpu_custom_call.1
$region0: #{tpu_custom_call.1}
  #allocation0 [shape = 'u32[]', space=smem, size = 0x4, offset = 0x4, fixed_abs, tag = 'smem constant byte address 0x4 - core index']
  #allocation1 [shape = 'u32[144,128]{1,0:T(1,128)}', space=vmem, size = 0x12000, scoped, tag = 'internal scratch']
  %s0 = inlined_call_operand.hbm [shape: bf16[16,16], index: 0, kind: input, shape index: {}]
  %s1 = inlined_call_operand.hbm [shape: bf16[16,128], index: 1, kind: input, shape index: {}]
  %s2 = inlined_call_operand.vmem [shape: f32[1,128], index: 2, kind: input, shape index: {}]
  %s3 = inlined_call_operand.hbm [shape: bf16[128,128], index: 3, kind: input, shape index: {}]
  %s4 = inlined_call_operand.vmem [shape: f32[1,128], index: 4, kind: input, shape index: {}]
  %s5 = inlined_call_operand.hbm [shape: bf16[128,128], index: 5, kind: input, shape index: {}]
  %s6 = inlined_call_operand.vmem [shape: f32[1,128], index: 6, kind: input, shape index: {}]
  %s7 = inlined_call_operand.hbm [shape: f32[16,128], index: 7, kind: output, shape index: {}]
  %s8 = sld [smem:[#allocation0]]
  $region54: #{tpu_custom_call.1} parent=0
    _
  %s10 = ssub.s32 1, %s8
  %s11 = scalar_select 0, %s10, %s8
  $region1: #{tpu_custom_call.1} parent=0
    #allocation2 [shape = 'u8[4096]{0}', space=vmem, size = 0x1000, scoped, tag = 'input window, operand 0, single buffered']
    #allocation3 [shape = 's32[1]{0}', space=sflag, size = 0x4, scoped, tag = 'scoped memory for tpu_custom_call.1']
    #allocation4 [shape = 's32[1]{0}', space=sflag, size = 0x4, scoped, tag = 'scoped memory for tpu_custom_call.1']
    #allocation5 [shape = 'u8[4096]{0}', space=vmem, size = 0x1000, scoped, tag = 'input window, operand 1, single buffered']
    #allocation6 [shape = 's32[1]{0}', space=sflag, size = 0x4, scoped, tag = 'scoped memory for tpu_custom_call.1']
    #allocation7 [shape = 'u8[32768]{0}', space=vmem, size = 0x8000, scoped, tag = 'input window, operand 3, single buffered']
    #allocation8 [shape = 'u8[32768]{0}', space=vmem, size = 0x8000, scoped, tag = 'input window, operand 5, single buffered']
    #allocation9 [shape = 's32[1]{0}', space=sflag, size = 0x4, scoped, tag = 'scoped memory for tpu_custom_call.1']
    #allocation10 [shape = 'u8[8192]{0}', space=vmem, size = 0x2000, scoped, tag = 'output window, operand 0, single buffered']
    %12 = vsyncpa [#allocation3], 0
    %13 = vsyncpa [#allocation6], 0
    %14 = vsyncpa [#allocation9], 0
    %15 = vsyncpa [#allocation4], 0
    // Predicated region
    $region2: #{tpu_custom_call.1} parent=1 // pred_check
      _
    $region3: #{tpu_custom_call.1} parent=1 // pred_check_branch
      %17 = sbr.rel (0) target = $region5
    $region4: #{tpu_custom_call.1} parent=1 // pred_region
      %s19 = ssub.s32 128, 128
      %20 = vsyncadd [#allocation3], %s19
      %s21 = sshll.u32 [#allocation2], 4
      %s22 = int_to_ptr.vmem [resolvable:$true] %s21
      %27 = dma.hbm_to_vmem [thread:$0]  %s0, 128, %s22, [#allocation3], 64, 64, 4
    $region5: #{tpu_custom_call.1} parent=1 // pred_fallthru
      _
    // Predicated region
    $region6: #{tpu_custom_call.1} parent=1 // pred_check
      _
    $region7: #{tpu_custom_call.1} parent=1 // pred_check_branch
      %29 = sbr.rel (0) target = $region9
    $region8: #{tpu_custom_call.1} parent=1 // pred_region
      %s31 = ssub.s32 128, 128
      %32 = vsyncadd [#allocation6], %s31
      %s33 = sshll.u32 [#allocation5], 4
      %s34 = int_to_ptr.vmem [resolvable:$true] %s33
      %39 = dma.hbm_to_vmem [thread:$0]  %s1, 128, %s34, [#allocation6], 64, 64, 4
    $region9: #{tpu_custom_call.1} parent=1 // pred_fallthru
      _
    // Predicated region
    $region10: #{tpu_custom_call.1} parent=1 // pred_check
      _
    $region11: #{tpu_custom_call.1} parent=1 // pred_check_branch
      %41 = sbr.rel (0) target = $region13
    $region12: #{tpu_custom_call.1} parent=1 // pred_region
      _
    $region13: #{tpu_custom_call.1} parent=1 // pred_fallthru
      _
    // Predicated region
    $region14: #{tpu_custom_call.1} parent=1 // pred_check
      _
    $region15: #{tpu_custom_call.1} parent=1 // pred_check_branch
      %43 = sbr.rel (0) target = $region17
    $region16: #{tpu_custom_call.1} parent=1 // pred_region
      %s45 = ssub.s32 1024, 1024
      %46 = vsyncadd [#allocation6], %s45
      %s47 = sshll.u32 [#allocation7], 4
      %s48 = int_to_ptr.vmem [resolvable:$true] %s47
      %53 = dma.hbm_to_vmem [thread:$0]  %s3, 1024, %s48, [#allocation6], 64, 64, 4
    $region17: #{tpu_custom_call.1} parent=1 // pred_fallthru
      _
    // Predicated region
    $region18: #{tpu_custom_call.1} parent=1 // pred_check
      _
    $region19: #{tpu_custom_call.1} parent=1 // pred_check_branch
      %55 = sbr.rel (0) target = $region21
    $region20: #{tpu_custom_call.1} parent=1 // pred_region
      _
    $region21: #{tpu_custom_call.1} parent=1 // pred_fallthru
      _
    // Predicated region
    $region22: #{tpu_custom_call.1} parent=1 // pred_check
      _
    $region23: #{tpu_custom_call.1} parent=1 // pred_check_branch
      %57 = sbr.rel (0) target = $region25
    $region24: #{tpu_custom_call.1} parent=1 // pred_region
      %s59 = ssub.s32 1024, 1024
      %60 = vsyncadd [#allocation9], %s59
      %s61 = sshll.u32 [#allocation8], 4
      %s62 = int_to_ptr.vmem [resolvable:$true] %s61
      %67 = dma.hbm_to_vmem [thread:$0]  %s5, 1024, %s62, [#allocation9], 64, 64, 4
    $region25: #{tpu_custom_call.1} parent=1 // pred_fallthru
      _
    // Predicated region
    $region26: #{tpu_custom_call.1} parent=1 // pred_check
      _
    $region27: #{tpu_custom_call.1} parent=1 // pred_check_branch
      %69 = sbr.rel (0) target = $region29
    $region28: #{tpu_custom_call.1} parent=1 // pred_region
      _
    $region29: #{tpu_custom_call.1} parent=1 // pred_fallthru
      _
    // Predicated region
    $region30: #{tpu_custom_call.1} parent=1 // pred_check
      _
    $region31: #{tpu_custom_call.1} parent=1 // pred_check_branch
      %71 = sbr.rel (0) target = $region33
    $region32: #{tpu_custom_call.1} parent=1 // pred_region
      %72 = dma.done [#allocation3], 128
    $region33: #{tpu_custom_call.1} parent=1 // pred_fallthru
      _
    // Predicated region
    $region34: #{tpu_custom_call.1} parent=1 // pred_check
      _
    $region35: #{tpu_custom_call.1} parent=1 // pred_check_branch
      %74 = sbr.rel (0) target = $region37
    $region36: #{tpu_custom_call.1} parent=1 // pred_region
      %75 = dma.done [#allocation6], 128
    $region37: #{tpu_custom_call.1} parent=1 // pred_fallthru
      _
    // Predicated region
    $region38: #{tpu_custom_call.1} parent=1 // pred_check
      _
    $region39: #{tpu_custom_call.1} parent=1 // pred_check_branch
      %77 = sbr.rel (0) target = $region41
    $region40: #{tpu_custom_call.1} parent=1 // pred_region
      %78 = dma.done [#allocation6], 1024
    $region41: #{tpu_custom_call.1} parent=1 // pred_fallthru
      _
    // Predicated region
    $region42: #{tpu_custom_call.1} parent=1 // pred_check
      _
    $region43: #{tpu_custom_call.1} parent=1 // pred_check_branch
      %80 = sbr.rel (0) target = $region45
    $region44: #{tpu_custom_call.1} parent=1 // pred_region
      %81 = dma.done [#allocation9], 1024
    $region45: #{tpu_custom_call.1} parent=1 // pred_fallthru
      _
    %v83 = vld [vmem:[#allocation2] sm:$0xf]
    %v84 = vld [vmem:[#allocation2 + $0x4] sm:$0xf]
    %v85 = vld [vmem:[#allocation5] sm:$0xf]
    %v86 = vld [vmem:[#allocation5 + $0x4] sm:$0xf]
    %v87 = vld [vmem:[%s2] sm:$0x1]
    %v89 = vlaneseq
    %v90 = vshrl.u32 %v89, 7
    %v91 = vsub.s32 0, %v90
    %v92 = vrot.slane %v87, %v91
    %v96 = vunpack.c.l.b16 %v83
    %v97 = vunpack.c.l.b16 %v84
    %v98 = vpack.c.b16 %v97, %v96
    %v101 = vunpack.c.l.b16 %v85
    %v102 = vunpack.c.l.b16 %v86
    %v103 = vpack.c.b16 %v102, %v101
    %vm105 = vcmask 130048
    %v107 = vsel %vm105, %v98, 0
    %109 = vmatprep.subr.bf16.mxu0 0
    %110 = vmatpush1.bf16.msra.mxu0 0
    %111 = vmatprep.subr.bf16.mxu0 0
    %112 = vmatpush1.bf16.msra.mxu0 0
    %113 = vmatprep.subr.bf16.mxu0 0
    %114 = vmatpush1.bf16.msra.mxu0 0
    %115 = vmatprep.subr.bf16.mxu0 0
    %116 = vmatpush1.bf16.msra.mxu0 0
    %117 = vmatprep.subr.bf16.mxu0 0
    %118 = vmatpush1.bf16.msra.mxu0 0
    %119 = vmatprep.subr.bf16.mxu0 0
    %120 = vmatpush1.bf16.msra.mxu0 0
    %121 = vmatprep.subr.bf16.mxu0 0
    %122 = vmatpush1.bf16.msra.mxu0 0
    %123 = vmatprep.subr.bf16.mxu0 0
    %124 = vmatpush1.bf16.msra.mxu0 %v103
    %125 = vmatprep.subr.bf16.mxu0 0
    %126 = vmatpush2.bf16.msra.mxu0 0
    %127 = vmatprep.subr.bf16.mxu0 0
    %128 = vmatpush2.bf16.msra.mxu0 0
    %129 = vmatprep.subr.bf16.mxu0 0
    %130 = vmatpush2.bf16.msra.mxu0 0
    %131 = vmatprep.subr.bf16.mxu0 0
    %132 = vmatpush2.bf16.msra.mxu0 0
    %133 = vmatprep.subr.bf16.mxu0 0
    %134 = vmatpush2.bf16.msra.mxu0 0
    %135 = vmatprep.subr.bf16.mxu0 0
    %136 = vmatpush2.bf16.msra.mxu0 0
    %137 = vmatprep.subr.bf16.mxu0 0
    %138 = vmatpush2.bf16.msra.mxu0 0
    %139 = vmatprep.subr.bf16.mxu0 0
    %140 = vmatpush2.bf16.msra.mxu0 0
    %141 = vmatprep.mubr.bf16.mxu0 0
    %142 = vmatmul.mubr.bf16.gmra.mxu0 %v107
    %v143 = vpop.f32.mrf.mxu0
    %v144 = vadd.f32 %v92, %v143
    %v145 = vpop.f32.mrf.mxu0
    %v146 = vpop.f32.mrf.mxu0
    %v147 = vadd.f32 %v92, %v146
    %v148 = vpop.f32.mrf.mxu0
    %149 = vdwg.mxu0
    %v150 = vxor.u32 %v144, 2147483648
    %v151 = vxor.u32 %v147, 2147483648
    %v152 = vmul.f32 %v150, 1.442695
    %v153 = vpow.pop %v152
    %v154 = vmul.f32 %v151, 1.442695
    %v155 = vpow.pop %v154
    %v156 = vadd.f32 %v153, 1.0
    %v157 = vadd.f32 %v155, 1.0
    %v158 = vrcp.pop %v156
    %v159 = vmul.f32 1.0, %v158
    %v160 = vrcp.pop %v157
    %v161 = vmul.f32 1.0, %v160
    %v162 = vmul.f32 %v144, %v159
    %v163 = vmul.f32 %v147, %v161
    %v164 = vpack.c.bf16 %v163, %v162
    %v165 = vld [vmem:[#allocation7] sm:$0xf]
    %v166 = vld [vmem:[#allocation7 + $0x4] sm:$0xf]
    %v167 = vld [vmem:[#allocation7 + $0x8] sm:$0xf]
    %v168 = vld [vmem:[#allocation7 + $0xc] sm:$0xf]
    %v169 = vld [vmem:[#allocation7 + $0x10] sm:$0xf]
    %v170 = vld [vmem:[#allocation7 + $0x14] sm:$0xf]
    %v171 = vld [vmem:[#allocation7 + $0x18] sm:$0xf]
    %v172 = vld [vmem:[#allocation7 + $0x1c] sm:$0xf]
    %v173 = vld [vmem:[#allocation7 + $0x20] sm:$0xf]
    %v174 = vld [vmem:[#allocation7 + $0x24] sm:$0xf]
    %v175 = vld [vmem:[#allocation7 + $0x28] sm:$0xf]
    %v176 = vld [vmem:[#allocation7 + $0x2c] sm:$0xf]
    %v177 = vld [vmem:[#allocation7 + $0x30] sm:$0xf]
    %v178 = vld [vmem:[#allocation7 + $0x34] sm:$0xf]
    %v179 = vld [vmem:[#allocation7 + $0x38] sm:$0xf]
    %v180 = vld [vmem:[#allocation7 + $0x3c] sm:$0xf]
    %v181 = vld [vmem:[%s4] sm:$0x1]
    %v183 = vlaneseq
    %v184 = vshrl.u32 %v183, 7
    %v185 = vsub.s32 0, %v184
    %v186 = vrot.slane %v181, %v185
    %v204 = vunpack.c.l.b16 %v165
    %v205 = vunpack.c.l.b16 %v166
    %v206 = vunpack.c.l.b16 %v167
    %v207 = vunpack.c.l.b16 %v168
    %v208 = vunpack.c.l.b16 %v169
    %v209 = vunpack.c.l.b16 %v170
    %v210 = vunpack.c.l.b16 %v171
    %v211 = vunpack.c.l.b16 %v172
    %v212 = vunpack.c.l.b16 %v173
    %v213 = vunpack.c.l.b16 %v174
    %v214 = vunpack.c.l.b16 %v175
    %v215 = vunpack.c.l.b16 %v176
    %v216 = vunpack.c.l.b16 %v177
    %v217 = vunpack.c.l.b16 %v178
    %v218 = vunpack.c.l.b16 %v179
    %v219 = vunpack.c.l.b16 %v180
    %v220 = vpack.c.b16 %v205, %v204
    %v221 = vpack.c.b16 %v207, %v206
    %v222 = vpack.c.b16 %v209, %v208
    %v223 = vpack.c.b16 %v211, %v210
    %v224 = vpack.c.b16 %v213, %v212
    %v225 = vpack.c.b16 %v215, %v214
    %v226 = vpack.c.b16 %v217, %v216
    %v227 = vpack.c.b16 %v219, %v218
    %236 = vmatprep.subr.bf16.mxu0 0
    %237 = vmatpush1.bf16.msra.mxu0 %v227
    %238 = vmatprep.subr.bf16.mxu0 0
    %239 = vmatpush1.bf16.msra.mxu0 %v226
    %240 = vmatprep.subr.bf16.mxu0 0
    %241 = vmatpush1.bf16.msra.mxu0 %v225
    %242 = vmatprep.subr.bf16.mxu0 0
    %243 = vmatpush1.bf16.msra.mxu0 %v224
    %244 = vmatprep.subr.bf16.mxu0 0
    %245 = vmatpush1.bf16.msra.mxu0 %v223
    %246 = vmatprep.subr.bf16.mxu0 0
    %247 = vmatpush1.bf16.msra.mxu0 %v222
    %248 = vmatprep.subr.bf16.mxu0 0
    %249 = vmatpush1.bf16.msra.mxu0 %v221
    %250 = vmatprep.subr.bf16.mxu0 0
    %251 = vmatpush1.bf16.msra.mxu0 %v220
    %252 = vmatprep.subr.bf16.mxu0 0
    %253 = vmatpush2.bf16.msra.mxu0 0
    %254 = vmatprep.subr.bf16.mxu0 0
    %255 = vmatpush2.bf16.msra.mxu0 0
    %256 = vmatprep.subr.bf16.mxu0 0
    %257 = vmatpush2.bf16.msra.mxu0 0
    %258 = vmatprep.subr.bf16.mxu0 0
    %259 = vmatpush2.bf16.msra.mxu0 0
    %260 = vmatprep.subr.bf16.mxu0 0
    %261 = vmatpush2.bf16.msra.mxu0 0
    %262 = vmatprep.subr.bf16.mxu0 0
    %263 = vmatpush2.bf16.msra.mxu0 0
    %264 = vmatprep.subr.bf16.mxu0 0
    %265 = vmatpush2.bf16.msra.mxu0 0
    %266 = vmatprep.subr.bf16.mxu0 0
    %267 = vmatpush2.bf16.msra.mxu0 0
    %268 = vmatprep.mubr.bf16.mxu0 0
    %269 = vmatmul.mubr.bf16.gmra.mxu0 %v164
    %v270 = vpop.f32.mrf.mxu0
    %v271 = vadd.f32 %v186, %v270
    %v272 = vpop.f32.mrf.mxu0
    %v273 = vpop.f32.mrf.mxu0
    %v274 = vadd.f32 %v186, %v273
    %v275 = vpop.f32.mrf.mxu0
    %276 = vdwg.mxu0
    %v277 = vxor.u32 %v271, 2147483648
    %v278 = vxor.u32 %v274, 2147483648
    %v279 = vmul.f32 %v277, 1.442695
    %v280 = vpow.pop %v279
    %v281 = vmul.f32 %v278, 1.442695
    %v282 = vpow.pop %v281
    %v283 = vadd.f32 %v280, 1.0
    %v284 = vadd.f32 %v282, 1.0
    %v285 = vrcp.pop %v283
    %v286 = vmul.f32 1.0, %v285
    %v287 = vrcp.pop %v284
    %v288 = vmul.f32 1.0, %v287
    %v289 = vmul.f32 %v271, %v286
    %v290 = vmul.f32 %v274, %v288
    %v291 = vpack.c.bf16 %v290, %v289
    %v292 = vld [vmem:[#allocation8] sm:$0xf]
    %v293 = vld [vmem:[#allocation8 + $0x4] sm:$0xf]
    %v294 = vld [vmem:[#allocation8 + $0x8] sm:$0xf]
    %v295 = vld [vmem:[#allocation8 + $0xc] sm:$0xf]
    %v296 = vld [vmem:[#allocation8 + $0x10] sm:$0xf]
    %v297 = vld [vmem:[#allocation8 + $0x14] sm:$0xf]
    %v298 = vld [vmem:[#allocation8 + $0x18] sm:$0xf]
    %v299 = vld [vmem:[#allocation8 + $0x1c] sm:$0xf]
    %v300 = vld [vmem:[#allocation8 + $0x20] sm:$0xf]
    %v301 = vld [vmem:[#allocation8 + $0x24] sm:$0xf]
    %v302 = vld [vmem:[#allocation8 + $0x28] sm:$0xf]
    %v303 = vld [vmem:[#allocation8 + $0x2c] sm:$0xf]
    %v304 = vld [vmem:[#allocation8 + $0x30] sm:$0xf]
    %v305 = vld [vmem:[#allocation8 + $0x34] sm:$0xf]
    %v306 = vld [vmem:[#allocation8 + $0x38] sm:$0xf]
    %v307 = vld [vmem:[#allocation8 + $0x3c] sm:$0xf]
    %v308 = vld [vmem:[%s6] sm:$0x1]
    %v310 = vlaneseq
    %v311 = vshrl.u32 %v310, 7
    %v312 = vsub.s32 0, %v311
    %v313 = vrot.slane %v308, %v312
    %v331 = vunpack.c.l.b16 %v292
    %v332 = vunpack.c.l.b16 %v293
    %v333 = vunpack.c.l.b16 %v294
    %v334 = vunpack.c.l.b16 %v295
    %v335 = vunpack.c.l.b16 %v296
    %v336 = vunpack.c.l.b16 %v297
    %v337 = vunpack.c.l.b16 %v298
    %v338 = vunpack.c.l.b16 %v299
    %v339 = vunpack.c.l.b16 %v300
    %v340 = vunpack.c.l.b16 %v301
    %v341 = vunpack.c.l.b16 %v302
    %v342 = vunpack.c.l.b16 %v303
    %v343 = vunpack.c.l.b16 %v304
    %v344 = vunpack.c.l.b16 %v305
    %v345 = vunpack.c.l.b16 %v306
    %v346 = vunpack.c.l.b16 %v307
    %v347 = vpack.c.b16 %v332, %v331
    %v348 = vpack.c.b16 %v334, %v333
    %v349 = vpack.c.b16 %v336, %v335
    %v350 = vpack.c.b16 %v338, %v337
    %v351 = vpack.c.b16 %v340, %v339
    %v352 = vpack.c.b16 %v342, %v341
    %v353 = vpack.c.b16 %v344, %v343
    %v354 = vpack.c.b16 %v346, %v345
    %363 = vmatprep.subr.bf16.mxu0 0
    %364 = vmatpush1.bf16.msra.mxu0 %v354
    %365 = vmatprep.subr.bf16.mxu0 0
    %366 = vmatpush1.bf16.msra.mxu0 %v353
    %367 = vmatprep.subr.bf16.mxu0 0
    %368 = vmatpush1.bf16.msra.mxu0 %v352
    %369 = vmatprep.subr.bf16.mxu0 0
    %370 = vmatpush1.bf16.msra.mxu0 %v351
    %371 = vmatprep.subr.bf16.mxu0 0
    %372 = vmatpush1.bf16.msra.mxu0 %v350
    %373 = vmatprep.subr.bf16.mxu0 0
    %374 = vmatpush1.bf16.msra.mxu0 %v349
    %375 = vmatprep.subr.bf16.mxu0 0
    %376 = vmatpush1.bf16.msra.mxu0 %v348
    %377 = vmatprep.subr.bf16.mxu0 0
    %378 = vmatpush1.bf16.msra.mxu0 %v347
    %379 = vmatprep.subr.bf16.mxu0 0
    %380 = vmatpush2.bf16.msra.mxu0 0
    %381 = vmatprep.subr.bf16.mxu0 0
    %382 = vmatpush2.bf16.msra.mxu0 0
    %383 = vmatprep.subr.bf16.mxu0 0
    %384 = vmatpush2.bf16.msra.mxu0 0
    %385 = vmatprep.subr.bf16.mxu0 0
    %386 = vmatpush2.bf16.msra.mxu0 0
    %387 = vmatprep.subr.bf16.mxu0 0
    %388 = vmatpush2.bf16.msra.mxu0 0
    %389 = vmatprep.subr.bf16.mxu0 0
    %390 = vmatpush2.bf16.msra.mxu0 0
    %391 = vmatprep.subr.bf16.mxu0 0
    %392 = vmatpush2.bf16.msra.mxu0 0
    %393 = vmatprep.subr.bf16.mxu0 0
    %394 = vmatpush2.bf16.msra.mxu0 0
    %395 = vmatprep.mubr.bf16.mxu0 0
    %396 = vmatmul.mubr.bf16.gmra.mxu0 %v291
    %v397 = vpop.f32.mrf.mxu0
    %v398 = vadd.f32 %v313, %v397
    %v399 = vpop.f32.mrf.mxu0
    %v400 = vpop.f32.mrf.mxu0
    %v401 = vadd.f32 %v313, %v400
    %v402 = vpop.f32.mrf.mxu0
    %403 = vdwg.mxu0
    %404 = vst [vmem:[#allocation10] sm:$0xff] %v398
    %405 = vst [vmem:[#allocation10 + $0x8] sm:$0xff] %v401
    // Predicated region
    $region46: #{tpu_custom_call.1} parent=1 // pred_check
      _
    $region47: #{tpu_custom_call.1} parent=1 // pred_check_branch
      %407 = sbr.rel (0) target = $region49
    $region48: #{tpu_custom_call.1} parent=1 // pred_region
      %s409 = ssub.s32 256, 256
      %410 = vsyncadd [#allocation4], %s409
      %s411 = sshll.u32 [#allocation10], 4
      %s412 = int_to_ptr.vmem [resolvable:$true] %s411
      %417 = dma.vmem_to_hbm [thread:$0]  %s412, 256, %s7, [#allocation4], 128, 128, 8
    $region49: #{tpu_custom_call.1} parent=1 // pred_fallthru
      _
    // Predicated region
    $region50: #{tpu_custom_call.1} parent=1 // pred_check
      _
    $region51: #{tpu_custom_call.1} parent=1 // pred_check_branch
      %419 = sbr.rel (0) target = $region53
    $region52: #{tpu_custom_call.1} parent=1 // pred_region
      %420 = dma.done [#allocation4], 256
    $region53: #{tpu_custom_call.1} parent=1 // pred_fallthru
      _
    %421 = vsyncpa [#allocation3], 1
    %422 = vsyncpa [#allocation6], 1
    %423 = vsyncpa [#allocation9], 1
    %424 = vsyncpa [#allocation4], 1

// kernel: tpu_custom_call.1
$region0: #{tpu_custom_call.1}
  #allocation0 [shape = 'u32[]', space=smem, size = 0x4, offset = 0x4, fixed_abs, tag = 'smem constant byte address 0x4 - core index']
  #allocation1 [shape = 'u32[144,128]{1,0:T(1,128)}', space=vmem, size = 0x12000, scoped, tag = 'internal scratch']
  %s0 = inlined_call_operand.hbm [shape: bf16[16,16], index: 0, kind: input, shape index: {}]
  %s1 = inlined_call_operand.hbm [shape: bf16[16,128], index: 1, kind: input, shape index: {}]
  %s2 = inlined_call_operand.vmem [shape: f32[1,128], index: 2, kind: input, shape index: {}]
  %s3 = inlined_call_operand.hbm [shape: bf16[128,128], index: 3, kind: input, shape index: {}]
  %s4 = inlined_call_operand.vmem [shape: f32[1,128], index: 4, kind: input, shape index: {}]
  %s5 = inlined_call_operand.hbm [shape: bf16[128,128], index: 5, kind: input, shape index: {}]
  %s6 = inlined_call_operand.vmem [shape: f32[1,128], index: 6, kind: input, shape index: {}]
  %s7 = inlined_call_operand.hbm [shape: f32[16,128], index: 7, kind: output, shape index: {}]
  %s8 = sld [smem:[#allocation0]]
  $region54: #{tpu_custom_call.1} parent=0
    _
  %s10 = ssub.s32 1, %s8
  %s11 = scalar_select 0, %s10, %s8
  $region1: #{tpu_custom_call.1} parent=0
    #allocation2 [shape = 'u8[4096]{0}', space=vmem, size = 0x1000, scoped, tag = 'input window, operand 0, single buffered']
    #allocation3 [shape = 's32[1]{0}', space=sflag, size = 0x4, scoped, tag = 'scoped memory for tpu_custom_call.1']
    #allocation4 [shape = 's32[1]{0}', space=sflag, size = 0x4, scoped, tag = 'scoped memory for tpu_custom_call.1']
    #allocation5 [shape = 'u8[4096]{0}', space=vmem, size = 0x1000, scoped, tag = 'input window, operand 1, single buffered']
    #allocation6 [shape = 's32[1]{0}', space=sflag, size = 0x4, scoped, tag = 'scoped memory for tpu_custom_call.1']
    #allocation7 [shape = 'u8[32768]{0}', space=vmem, size = 0x8000, scoped, tag = 'input window, operand 3, single buffered']
    #allocation8 [shape = 'u8[32768]{0}', space=vmem, size = 0x8000, scoped, tag = 'input window, operand 5, single buffered']
    #allocation9 [shape = 's32[1]{0}', space=sflag, size = 0x4, scoped, tag = 'scoped memory for tpu_custom_call.1']
    #allocation10 [shape = 'u8[8192]{0}', space=vmem, size = 0x2000, scoped, tag = 'output window, operand 0, single buffered']
    %12 = vsyncpa [#allocation3], 0
    %13 = vsyncpa [#allocation6], 0
    %14 = vsyncpa [#allocation9], 0
    %15 = vsyncpa [#allocation4], 0
    // Predicated region
    $region2: #{tpu_custom_call.1} parent=1 // pred_check
      _
    $region3: #{tpu_custom_call.1} parent=1 // pred_check_branch
      %17 = sbr.rel (0) target = $region5
    $region4: #{tpu_custom_call.1} parent=1 // pred_region
      %s19 = ssub.s32 128, 128
      %20 = vsyncadd [#allocation3], %s19
      %s21 = sshll.u32 [#allocation2], 4
      %s22 = int_to_ptr.vmem [resolvable:$true] %s21
      %27 = dma.hbm_to_vmem [thread:$0]  %s0, 128, %s22, [#allocation3], 64, 64, 4
    $region5: #{tpu_custom_call.1} parent=1 // pred_fallthru
      _
    // Predicated region
    $region6: #{tpu_custom_call.1} parent=1 // pred_check
      _
    $region7: #{tpu_custom_call.1} parent=1 // pred_check_branch
      %29 = sbr.rel (0) target = $region9
    $region8: #{tpu_custom_call.1} parent=1 // pred_region
      %s31 = ssub.s32 128, 128
      %32 = vsyncadd [#allocation6], %s31
      %s33 = sshll.u32 [#allocation5], 4
      %s34 = int_to_ptr.vmem [resolvable:$true] %s33
      %39 = dma.hbm_to_vmem [thread:$0]  %s1, 128, %s34, [#allocation6], 64, 64, 4
    $region9: #{tpu_custom_call.1} parent=1 // pred_fallthru
      _
    // Predicated region
    $region10: #{tpu_custom_call.1} parent=1 // pred_check
      _
    $region11: #{tpu_custom_call.1} parent=1 // pred_check_branch
      %41 = sbr.rel (0) target = $region13
    $region12: #{tpu_custom_call.1} parent=1 // pred_region
      _
    $region13: #{tpu_custom_call.1} parent=1 // pred_fallthru
      _
    // Predicated region
    $region14: #{tpu_custom_call.1} parent=1 // pred_check
      _
    $region15: #{tpu_custom_call.1} parent=1 // pred_check_branch
      %43 = sbr.rel (0) target = $region17
    $region16: #{tpu_custom_call.1} parent=1 // pred_region
      %s45 = ssub.s32 1024, 1024
      %46 = vsyncadd [#allocation6], %s45
      %s47 = sshll.u32 [#allocation7], 4
      %s48 = int_to_ptr.vmem [resolvable:$true] %s47
      %53 = dma.hbm_to_vmem [thread:$0]  %s3, 1024, %s48, [#allocation6], 64, 64, 4
    $region17: #{tpu_custom_call.1} parent=1 // pred_fallthru
      _
    // Predicated region
    $region18: #{tpu_custom_call.1} parent=1 // pred_check
      _
    $region19: #{tpu_custom_call.1} parent=1 // pred_check_branch
      %55 = sbr.rel (0) target = $region21
    $region20: #{tpu_custom_call.1} parent=1 // pred_region
      _
    $region21: #{tpu_custom_call.1} parent=1 // pred_fallthru
      _
    // Predicated region
    $region22: #{tpu_custom_call.1} parent=1 // pred_check
      _
    $region23: #{tpu_custom_call.1} parent=1 // pred_check_branch
      %57 = sbr.rel (0) target = $region25
    $region24: #{tpu_custom_call.1} parent=1 // pred_region
      %s59 = ssub.s32 1024, 1024
      %60 = vsyncadd [#allocation9], %s59
      %s61 = sshll.u32 [#allocation8], 4
      %s62 = int_to_ptr.vmem [resolvable:$true] %s61
      %67 = dma.hbm_to_vmem [thread:$0]  %s5, 1024, %s62, [#allocation9], 64, 64, 4
    $region25: #{tpu_custom_call.1} parent=1 // pred_fallthru
      _
    // Predicated region
    $region26: #{tpu_custom_call.1} parent=1 // pred_check
      _
    $region27: #{tpu_custom_call.1} parent=1 // pred_check_branch
      %69 = sbr.rel (0) target = $region29
    $region28: #{tpu_custom_call.1} parent=1 // pred_region
      _
    $region29: #{tpu_custom_call.1} parent=1 // pred_fallthru
      _
    // Predicated region
    $region30: #{tpu_custom_call.1} parent=1 // pred_check
      _
    $region31: #{tpu_custom_call.1} parent=1 // pred_check_branch
      %71 = sbr.rel (0) target = $region33
    $region32: #{tpu_custom_call.1} parent=1 // pred_region
      %72 = dma.done [#allocation3], 128
    $region33: #{tpu_custom_call.1} parent=1 // pred_fallthru
      _
    // Predicated region
    $region34: #{tpu_custom_call.1} parent=1 // pred_check
      _
    $region35: #{tpu_custom_call.1} parent=1 // pred_check_branch
      %74 = sbr.rel (0) target = $region37
    $region36: #{tpu_custom_call.1} parent=1 // pred_region
      %75 = dma.done [#allocation6], 128
    $region37: #{tpu_custom_call.1} parent=1 // pred_fallthru
      _
    // Predicated region
    $region38: #{tpu_custom_call.1} parent=1 // pred_check
      _
    $region39: #{tpu_custom_call.1} parent=1 // pred_check_branch
      %77 = sbr.rel (0) target = $region41
    $region40: #{tpu_custom_call.1} parent=1 // pred_region
      %78 = dma.done [#allocation6], 1024
    $region41: #{tpu_custom_call.1} parent=1 // pred_fallthru
      _
    // Predicated region
    $region42: #{tpu_custom_call.1} parent=1 // pred_check
      _
    $region43: #{tpu_custom_call.1} parent=1 // pred_check_branch
      %80 = sbr.rel (0) target = $region45
    $region44: #{tpu_custom_call.1} parent=1 // pred_region
      %81 = dma.done [#allocation9], 1024
    $region45: #{tpu_custom_call.1} parent=1 // pred_fallthru
      _
    %v83 = vld [vmem:[#allocation2] sm:$0xf]
    %v84 = vld [vmem:[#allocation2 + $0x4] sm:$0xf]
    %v85 = vld [vmem:[#allocation5] sm:$0xf]
    %v86 = vld [vmem:[#allocation5 + $0x4] sm:$0xf]
    %v87 = vld [vmem:[%s2] sm:$0x1]
    %v89 = vlaneseq
    %v90 = vshrl.u32 %v89, 7
    %v91 = vsub.s32 0, %v90
    %v92 = vrot.slane %v87, %v91
    %v96 = vunpack.c.l.b16 %v83
    %v97 = vunpack.c.l.b16 %v84
    %v98 = vpack.c.b16 %v97, %v96
    %v101 = vunpack.c.l.b16 %v85
    %v102 = vunpack.c.l.b16 %v86
    %v103 = vpack.c.b16 %v102, %v101
    %vm105 = vcmask 130048
    %v107 = vsel %vm105, %v98, 0
    %109 = vmatprep.subr.bf16.mxu0 0
    %110 = vmatpush1.bf16.msra.mxu0 0
    %111 = vmatprep.subr.bf16.mxu0 0
    %112 = vmatpush1.bf16.msra.mxu0 0
    %113 = vmatprep.subr.bf16.mxu0 0
    %114 = vmatpush1.bf16.msra.mxu0 0
    %115 = vmatprep.subr.bf16.mxu0 0
    %116 = vmatpush1.bf16.msra.mxu0 0
    %117 = vmatprep.subr.bf16.mxu0 0
    %118 = vmatpush1.bf16.msra.mxu0 0
    %119 = vmatprep.subr.bf16.mxu0 0
    %120 = vmatpush1.bf16.msra.mxu0 0
    %121 = vmatprep.subr.bf16.mxu0 0
    %122 = vmatpush1.bf16.msra.mxu0 0
    %123 = vmatprep.subr.bf16.mxu0 0
    %124 = vmatpush1.bf16.msra.mxu0 %v103
    %125 = vmatprep.subr.bf16.mxu0 0
    %126 = vmatpush2.bf16.msra.mxu0 0
    %127 = vmatprep.subr.bf16.mxu0 0
    %128 = vmatpush2.bf16.msra.mxu0 0
    %129 = vmatprep.subr.bf16.mxu0 0
    %130 = vmatpush2.bf16.msra.mxu0 0
    %131 = vmatprep.subr.bf16.mxu0 0
    %132 = vmatpush2.bf16.msra.mxu0 0
    %133 = vmatprep.subr.bf16.mxu0 0
    %134 = vmatpush2.bf16.msra.mxu0 0
    %135 = vmatprep.subr.bf16.mxu0 0
    %136 = vmatpush2.bf16.msra.mxu0 0
    %137 = vmatprep.subr.bf16.mxu0 0
    %138 = vmatpush2.bf16.msra.mxu0 0
    %139 = vmatprep.subr.bf16.mxu0 0
    %140 = vmatpush2.bf16.msra.mxu0 0
    %141 = vmatprep.mubr.bf16.mxu0 0
    %142 = vmatmul.mubr.bf16.gmra.mxu0 %v107
    %v143 = vpop.f32.mrf.mxu0
    %v144 = vadd.f32 %v92, %v143
    %v145 = vpop.f32.mrf.mxu0
    %v146 = vpop.f32.mrf.mxu0
    %v147 = vadd.f32 %v92, %v146
    %v148 = vpop.f32.mrf.mxu0
    %149 = vdwg.mxu0
    %v150 = vxor.u32 %v144, 2147483648
    %v151 = vxor.u32 %v147, 2147483648
    %v152 = vmul.f32 %v150, 1.442695
    %v153 = vpow.pop %v152
    %v154 = vmul.f32 %v151, 1.442695
    %v155 = vpow.pop %v154
    %v156 = vadd.f32 %v153, 1.0
    %v157 = vadd.f32 %v155, 1.0
    %v158 = vrcp.pop %v156
    %v159 = vmul.f32 1.0, %v158
    %v160 = vrcp.pop %v157
    %v161 = vmul.f32 1.0, %v160
    %v162 = vmul.f32 %v144, %v159
    %v163 = vmul.f32 %v147, %v161
    %v164 = vpack.c.bf16 %v163, %v162
    %v165 = vld [vmem:[#allocation7] sm:$0xf]
    %v166 = vld [vmem:[#allocation7 + $0x4] sm:$0xf]
    %v167 = vld [vmem:[#allocation7 + $0x8] sm:$0xf]
    %v168 = vld [vmem:[#allocation7 + $0xc] sm:$0xf]
    %v169 = vld [vmem:[#allocation7 + $0x10] sm:$0xf]
    %v170 = vld [vmem:[#allocation7 + $0x14] sm:$0xf]
    %v171 = vld [vmem:[#allocation7 + $0x18] sm:$0xf]
    %v172 = vld [vmem:[#allocation7 + $0x1c] sm:$0xf]
    %v173 = vld [vmem:[#allocation7 + $0x20] sm:$0xf]
    %v174 = vld [vmem:[#allocation7 + $0x24] sm:$0xf]
    %v175 = vld [vmem:[#allocation7 + $0x28] sm:$0xf]
    %v176 = vld [vmem:[#allocation7 + $0x2c] sm:$0xf]
    %v177 = vld [vmem:[#allocation7 + $0x30] sm:$0xf]
    %v178 = vld [vmem:[#allocation7 + $0x34] sm:$0xf]
    %v179 = vld [vmem:[#allocation7 + $0x38] sm:$0xf]
    %v180 = vld [vmem:[#allocation7 + $0x3c] sm:$0xf]
    %v181 = vld [vmem:[%s4] sm:$0x1]
    %v183 = vlaneseq
    %v184 = vshrl.u32 %v183, 7
    %v185 = vsub.s32 0, %v184
    %v186 = vrot.slane %v181, %v185
    %v204 = vunpack.c.l.b16 %v165
    %v205 = vunpack.c.l.b16 %v166
    %v206 = vunpack.c.l.b16 %v167
    %v207 = vunpack.c.l.b16 %v168
    %v208 = vunpack.c.l.b16 %v169
    %v209 = vunpack.c.l.b16 %v170
    %v210 = vunpack.c.l.b16 %v171
    %v211 = vunpack.c.l.b16 %v172
    %v212 = vunpack.c.l.b16 %v173
    %v213 = vunpack.c.l.b16 %v174
    %v214 = vunpack.c.l.b16 %v175
    %v215 = vunpack.c.l.b16 %v176
    %v216 = vunpack.c.l.b16 %v177
    %v217 = vunpack.c.l.b16 %v178
    %v218 = vunpack.c.l.b16 %v179
    %v219 = vunpack.c.l.b16 %v180
    %v220 = vpack.c.b16 %v205, %v204
    %v221 = vpack.c.b16 %v207, %v206
    %v222 = vpack.c.b16 %v209, %v208
    %v223 = vpack.c.b16 %v211, %v210
    %v224 = vpack.c.b16 %v213, %v212
    %v225 = vpack.c.b16 %v215, %v214
    %v226 = vpack.c.b16 %v217, %v216
    %v227 = vpack.c.b16 %v219, %v218
    %236 = vmatprep.subr.bf16.mxu0 0
    %237 = vmatpush1.bf16.msra.mxu0 %v227
    %238 = vmatprep.subr.bf16.mxu0 0
    %239 = vmatpush1.bf16.msra.mxu0 %v226
    %240 = vmatprep.subr.bf16.mxu0 0
    %241 = vmatpush1.bf16.msra.mxu0 %v225
    %242 = vmatprep.subr.bf16.mxu0 0
    %243 = vmatpush1.bf16.msra.mxu0 %v224
    %244 = vmatprep.subr.bf16.mxu0 0
    %245 = vmatpush1.bf16.msra.mxu0 %v223
    %246 = vmatprep.subr.bf16.mxu0 0
    %247 = vmatpush1.bf16.msra.mxu0 %v222
    %248 = vmatprep.subr.bf16.mxu0 0
    %249 = vmatpush1.bf16.msra.mxu0 %v221
    %250 = vmatprep.subr.bf16.mxu0 0
    %251 = vmatpush1.bf16.msra.mxu0 %v220
    %252 = vmatprep.subr.bf16.mxu0 0
    %253 = vmatpush2.bf16.msra.mxu0 0
    %254 = vmatprep.subr.bf16.mxu0 0
    %255 = vmatpush2.bf16.msra.mxu0 0
    %256 = vmatprep.subr.bf16.mxu0 0
    %257 = vmatpush2.bf16.msra.mxu0 0
    %258 = vmatprep.subr.bf16.mxu0 0
    %259 = vmatpush2.bf16.msra.mxu0 0
    %260 = vmatprep.subr.bf16.mxu0 0
    %261 = vmatpush2.bf16.msra.mxu0 0
    %262 = vmatprep.subr.bf16.mxu0 0
    %263 = vmatpush2.bf16.msra.mxu0 0
    %264 = vmatprep.subr.bf16.mxu0 0
    %265 = vmatpush2.bf16.msra.mxu0 0
    %266 = vmatprep.subr.bf16.mxu0 0
    %267 = vmatpush2.bf16.msra.mxu0 0
    %268 = vmatprep.mubr.bf16.mxu0 0
    %269 = vmatmul.mubr.bf16.gmra.mxu0 %v164
    %v270 = vpop.f32.mrf.mxu0
    %v271 = vadd.f32 %v186, %v270
    %v272 = vpop.f32.mrf.mxu0
    %v273 = vpop.f32.mrf.mxu0
    %v274 = vadd.f32 %v186, %v273
    %v275 = vpop.f32.mrf.mxu0
    %276 = vdwg.mxu0
    %v277 = vxor.u32 %v271, 2147483648
    %v278 = vxor.u32 %v274, 2147483648
    %v279 = vmul.f32 %v277, 1.442695
    %v280 = vpow.pop %v279
    %v281 = vmul.f32 %v278, 1.442695
    %v282 = vpow.pop %v281
    %v283 = vadd.f32 %v280, 1.0
    %v284 = vadd.f32 %v282, 1.0
    %v285 = vrcp.pop %v283
    %v286 = vmul.f32 1.0, %v285
    %v287 = vrcp.pop %v284
    %v288 = vmul.f32 1.0, %v287
    %v289 = vmul.f32 %v271, %v286
    %v290 = vmul.f32 %v274, %v288
    %v291 = vpack.c.bf16 %v290, %v289
    %v292 = vld [vmem:[#allocation8] sm:$0xf]
    %v293 = vld [vmem:[#allocation8 + $0x4] sm:$0xf]
    %v294 = vld [vmem:[#allocation8 + $0x8] sm:$0xf]
    %v295 = vld [vmem:[#allocation8 + $0xc] sm:$0xf]
    %v296 = vld [vmem:[#allocation8 + $0x10] sm:$0xf]
    %v297 = vld [vmem:[#allocation8 + $0x14] sm:$0xf]
    %v298 = vld [vmem:[#allocation8 + $0x18] sm:$0xf]
    %v299 = vld [vmem:[#allocation8 + $0x1c] sm:$0xf]
    %v300 = vld [vmem:[#allocation8 + $0x20] sm:$0xf]
    %v301 = vld [vmem:[#allocation8 + $0x24] sm:$0xf]
    %v302 = vld [vmem:[#allocation8 + $0x28] sm:$0xf]
    %v303 = vld [vmem:[#allocation8 + $0x2c] sm:$0xf]
    %v304 = vld [vmem:[#allocation8 + $0x30] sm:$0xf]
    %v305 = vld [vmem:[#allocation8 + $0x34] sm:$0xf]
    %v306 = vld [vmem:[#allocation8 + $0x38] sm:$0xf]
    %v307 = vld [vmem:[#allocation8 + $0x3c] sm:$0xf]
    %v308 = vld [vmem:[%s6] sm:$0x1]
    %v310 = vlaneseq
    %v311 = vshrl.u32 %v310, 7
    %v312 = vsub.s32 0, %v311
    %v313 = vrot.slane %v308, %v312
    %v331 = vunpack.c.l.b16 %v292
    %v332 = vunpack.c.l.b16 %v293
    %v333 = vunpack.c.l.b16 %v294
    %v334 = vunpack.c.l.b16 %v295
    %v335 = vunpack.c.l.b16 %v296
    %v336 = vunpack.c.l.b16 %v297
    %v337 = vunpack.c.l.b16 %v298
    %v338 = vunpack.c.l.b16 %v299
    %v339 = vunpack.c.l.b16 %v300
    %v340 = vunpack.c.l.b16 %v301
    %v341 = vunpack.c.l.b16 %v302
    %v342 = vunpack.c.l.b16 %v303
    %v343 = vunpack.c.l.b16 %v304
    %v344 = vunpack.c.l.b16 %v305
    %v345 = vunpack.c.l.b16 %v306
    %v346 = vunpack.c.l.b16 %v307
    %v347 = vpack.c.b16 %v332, %v331
    %v348 = vpack.c.b16 %v334, %v333
    %v349 = vpack.c.b16 %v336, %v335
    %v350 = vpack.c.b16 %v338, %v337
    %v351 = vpack.c.b16 %v340, %v339
    %v352 = vpack.c.b16 %v342, %v341
    %v353 = vpack.c.b16 %v344, %v343
    %v354 = vpack.c.b16 %v346, %v345
    %363 = vmatprep.subr.bf16.mxu0 0
    %364 = vmatpush1.bf16.msra.mxu0 %v354
    %365 = vmatprep.subr.bf16.mxu0 0
    %366 = vmatpush1.bf16.msra.mxu0 %v353
    %367 = vmatprep.subr.bf16.mxu0 0
    %368 = vmatpush1.bf16.msra.mxu0 %v352
    %369 = vmatprep.subr.bf16.mxu0 0
    %370 = vmatpush1.bf16.msra.mxu0 %v351
    %371 = vmatprep.subr.bf16.mxu0 0
    %372 = vmatpush1.bf16.msra.mxu0 %v350
    %373 = vmatprep.subr.bf16.mxu0 0
    %374 = vmatpush1.bf16.msra.mxu0 %v349
    %375 = vmatprep.subr.bf16.mxu0 0
    %376 = vmatpush1.bf16.msra.mxu0 %v348
    %377 = vmatprep.subr.bf16.mxu0 0
    %378 = vmatpush1.bf16.msra.mxu0 %v347
    %379 = vmatprep.subr.bf16.mxu0 0
    %380 = vmatpush2.bf16.msra.mxu0 0
    %381 = vmatprep.subr.bf16.mxu0 0
    %382 = vmatpush2.bf16.msra.mxu0 0
    %383 = vmatprep.subr.bf16.mxu0 0
    %384 = vmatpush2.bf16.msra.mxu0 0
    %385 = vmatprep.subr.bf16.mxu0 0
    %386 = vmatpush2.bf16.msra.mxu0 0
    %387 = vmatprep.subr.bf16.mxu0 0
    %388 = vmatpush2.bf16.msra.mxu0 0
    %389 = vmatprep.subr.bf16.mxu0 0
    %390 = vmatpush2.bf16.msra.mxu0 0
    %391 = vmatprep.subr.bf16.mxu0 0
    %392 = vmatpush2.bf16.msra.mxu0 0
    %393 = vmatprep.subr.bf16.mxu0 0
    %394 = vmatpush2.bf16.msra.mxu0 0
    %395 = vmatprep.mubr.bf16.mxu0 0
    %396 = vmatmul.mubr.bf16.gmra.mxu0 %v291
    %v397 = vpop.f32.mrf.mxu0
    %v398 = vadd.f32 %v313, %v397
    %v399 = vpop.f32.mrf.mxu0
    %v400 = vpop.f32.mrf.mxu0
    %v401 = vadd.f32 %v313, %v400
    %v402 = vpop.f32.mrf.mxu0
    %403 = vdwg.mxu0
    %404 = vst [vmem:[#allocation10] sm:$0xff] %v398
    %405 = vst [vmem:[#allocation10 + $0x8] sm:$0xff] %v401
    // Predicated region
    $region46: #{tpu_custom_call.1} parent=1 // pred_check
      _
    $region47: #{tpu_custom_call.1} parent=1 // pred_check_branch
      %407 = sbr.rel (0) target = $region49
    $region48: #{tpu_custom_call.1} parent=1 // pred_region
      %s409 = ssub.s32 256, 256
      %410 = vsyncadd [#allocation4], %s409
      %s411 = sshll.u32 [#allocation10], 4
      %s412 = int_to_ptr.vmem [resolvable:$true] %s411
      %417 = dma.vmem_to_hbm [thread:$0]  %s412, 256, %s7, [#allocation4], 128, 128, 8
    $region49: #{tpu_custom_call.1} parent=1 // pred_fallthru
      _
    // Predicated region
    $region50: #{tpu_custom_call.1} parent=1 // pred_check
      _
    $region51: #{tpu_custom_call.1} parent=1 // pred_check_branch
      %419 = sbr.rel (0) target = $region53
    $region52: #{tpu_custom_call.1} parent=1 // pred_region
      %420 = dma.done [#allocation4], 256
    $region53: #{tpu_custom_call.1} parent=1 // pred_fallthru
      _
    %421 = vsyncpa [#allocation3], 1
    %422 = vsyncpa [#allocation6], 1
    %423 = vsyncpa [#allocation9], 1
    %424 = vsyncpa [#allocation4], 1

</llo_original>
